<compile_context>
chip_gen: v7x
topology: tpu7x:2x2x1
jax: 0.10.0
libtpu: 0.0.40
codegen_flags: <defaults>
</compile_context>

<pallas_src>
import functools

import numpy as np
import jax
import jax.numpy as jnp
from jax import lax
from jax.experimental import pallas as pl
from jax.experimental.pallas import tpu as pltpu


# ----------------------------------------------------------------------------
# Fused EResidualBlock kernel (one batch element per grid step)
# ----------------------------------------------------------------------------
def _eres_kernel(x_ref, m_ref, w1_ref, b1_ref, w2_ref, b2_ref, w3_ref, b3_ref,
                 o_ref, *, C, H, W):
    HW = H * W
    x = x_ref[0]                                   # (C, HW) f32, lane-dense

    # Static tap offsets; ordering must match the mask array and the weight
    # reshape done in the wrapper: t = (dy+1)*3 + (dx+1), rows = t*C + cin.
    offsets = [dy * W + dx for dy in (-1, 0, 1) for dx in (-1, 0, 1)]

    def conv3x3(v, w_r, b_r):
        taps = []
        for t, s in enumerate(offsets):
            if s == 0:
                taps.append(v)
            else:
                shifted = pltpu.roll(v, (-s) % HW, axis=1)   # lanes: XLU, cheap
                taps.append(shifted * m_ref[t])              # zero-pad semantics
        patches = jnp.concatenate(taps, axis=0)              # (9*C, HW)
        out = jnp.dot(w_r[...], patches, preferred_element_type=jnp.float32)
        return out + b_r[...]                                # (C, HW) + (C, 1)

    y = jnp.maximum(conv3x3(x, w1_ref, b1_ref), 0.0)         # conv1 + ReLU
    y = jnp.maximum(conv3x3(y, w2_ref, b2_ref), 0.0)         # conv2 + ReLU
    y = jnp.dot(w3_ref[...], y, preferred_element_type=jnp.float32) + b3_ref[...]
    o_ref[0] = jnp.maximum(y + x, 0.0).astype(o_ref.dtype)   # +residual, ReLU


# ----------------------------------------------------------------------------
# Weight / mask preparation helpers (trace-time, tiny)
# ----------------------------------------------------------------------------
def _grouped_to_dense(w, groups):
    """(Cout, Cin//g, K, K) grouped conv weight -> exact block-diagonal dense."""
    Cout, cin_g, K, _ = w.shape
    cout_g = Cout // groups
    Cin = cin_g * groups
    dense = jnp.zeros((Cout, Cin, K, K), w.dtype)
    for g in range(groups):
        dense = dense.at[g * cout_g:(g + 1) * cout_g,
                         g * cin_g:(g + 1) * cin_g, :, :].set(
            w[g * cout_g:(g + 1) * cout_g])
    return dense


def _im2col_weight(w_dense):
    """(Cout, Cin, K, K) torch layout -> (Cout, K*K*Cin), tap-major then Cin."""
    Cout, Cin, K, _ = w_dense.shape
    return jnp.transpose(w_dense, (0, 2, 3, 1)).reshape(Cout, K * K * Cin)


def _build_tap_masks(C, H, W):
    """(9, C, HW) f32 0/1 masks implementing zero 'same' padding per tap."""
    HW = H * W
    h = np.arange(HW) // W
    w = np.arange(HW) % W
    masks = []
    for dy in (-1, 0, 1):
        for dx in (-1, 0, 1):
            valid = (h + dy >= 0) & (h + dy < H) & (w + dx >= 0) & (w + dx < W)
            masks.append(np.broadcast_to(valid.astype(np.float32), (C, HW)))
    return jnp.asarray(np.stack(masks, axis=0))


# ----------------------------------------------------------------------------
# Public wrapper: NCHW in, NCHW out (matches the PyTorch module)
# ----------------------------------------------------------------------------
def eresidual_block(x_nchw, params, *, group=1):
    N, C, H, W = x_nchw.shape
    HW = H * W
    x = x_nchw.reshape(N, C, HW)              # free reshape -> lane-dense layout

    w1 = _im2col_weight(_grouped_to_dense(params["w1"], group))   # (C, 9*C)
    w2 = _im2col_weight(_grouped_to_dense(params["w2"], group))   # (C, 9*C)
    w3 = params["w3"].reshape(C, C)                               # 1x1 conv
    b1 = params["b1"].reshape(C, 1)
    b2 = params["b2"].reshape(C, 1)
    b3 = params["b3"].reshape(C, 1)
    masks = _build_tap_masks(C, H, W)                             # (9, C, HW)

    def full(a):
        return pl.BlockSpec(a.shape, lambda n, nd=a.ndim: (0,) * nd)

    flops = N * (2 * HW * C * (9 * C) * 2 + 2 * HW * C * C)
    bytes_accessed = 4 * (2 * N * C * HW + masks.size
                          + w1.size + w2.size + w3.size + 3 * C)

    out = pl.pallas_call(
        functools.partial(_eres_kernel, C=C, H=H, W=W),
        out_shape=jax.ShapeDtypeStruct((N, C, HW), jnp.float32),
        grid=(N,),
        in_specs=[
            pl.BlockSpec((1, C, HW), lambda n: (n, 0, 0)),
            full(masks), full(w1), full(b1), full(w2), full(b2),
            full(w3), full(b3),
        ],
        out_specs=pl.BlockSpec((1, C, HW), lambda n: (n, 0, 0)),
        compiler_params=pltpu.CompilerParams(
            dimension_semantics=("parallel",)),
        cost_estimate=pl.CostEstimate(
            flops=flops, transcendentals=0, bytes_accessed=bytes_accessed),
    )(x, masks, w1, b1, w2, b2, w3, b3)
    return out.reshape(N, C, H, W)


# ----------------------------------------------------------------------------
# Pure-JAX reference (mirrors the PyTorch module exactly)
# ----------------------------------------------------------------------------
def _eres_reference(x, params, *, group=1):
    def conv(v, w, b, groups, pad):
        y = lax.conv_general_dilated(
            v, w, window_strides=(1, 1), padding=[(pad, pad), (pad, pad)],
            dimension_numbers=("NCHW", "OIHW", "NCHW"),
            feature_group_count=groups)
        return y + b[None, :, None, None]

    y = jax.nn.relu(conv(x, params["w1"], params["b1"], group, 1))
    y = jax.nn.relu(conv(y, params["w2"], params["b2"], group, 1))
    y = conv(y, params["w3"], params["b3"], 1, 0)
    return jax.nn.relu(y + x)


# ----------------------------------------------------------------------------
# Deterministic parameter init (PyTorch weight layout: OIHW, grouped)
# ----------------------------------------------------------------------------
def init_params(key, C, group):
    ks = jax.random.split(key, 6)
    cin_g = C // group
    return {
        "w1": jax.random.normal(ks[0], (C, cin_g, 3, 3), jnp.float32) * 0.1,
        "b1": jax.random.normal(ks[1], (C,), jnp.float32) * 0.05,
        "w2": jax.random.normal(ks[2], (C, cin_g, 3, 3), jnp.float32) * 0.1,
        "b2": jax.random.normal(ks[3], (C,), jnp.float32) * 0.05,
        "w3": jax.random.normal(ks[4], (C, C, 1, 1), jnp.float32) * 0.1,
        "b3": jax.random.normal(ks[5], (C,), jnp.float32) * 0.05,
    }


# ----------------------------------------------------------------------------
if __name__ == "__main__":
    key = jax.random.PRNGKey(0)
    pkey, xkey = jax.random.split(key)

    N, C, H, W, group = 2, 16, 16, 16, 4
    params = init_params(pkey, C, group)
    x = jax.random.normal(xkey, (N, C, H, W), jnp.float32)

    fwd = jax.jit(functools.partial(eresidual_block, group=group))
    out = fwd(x, params)
    jax.block_until_ready(out)

    ref = _eres_reference(x, params, group=group)
    err = float(jnp.max(jnp.abs(out - ref)))
    assert out.shape == (N, C, H, W)
    assert err < 1e-4, f"max abs err {err}"
    print("KERNEL_OK")
</pallas_src>

<mosaic_0001>
module attributes {stable_mosaic.version = 11 : i64} {
  func.func @_eres_kernel(%arg0: i32, %arg1: memref<1x16x256xf32, #tpu.memory_space<vmem>>, %arg2: memref<9x16x256xf32, #tpu.memory_space<vmem>>, %arg3: memref<16x144xf32, #tpu.memory_space<vmem>>, %arg4: memref<16x1xf32, #tpu.memory_space<vmem>>, %arg5: memref<16x144xf32, #tpu.memory_space<vmem>>, %arg6: memref<16x1xf32, #tpu.memory_space<vmem>>, %arg7: memref<16x16xf32, #tpu.memory_space<vmem>>, %arg8: memref<16x1xf32, #tpu.memory_space<vmem>>, %arg9: memref<1x16x256xf32, #tpu.memory_space<vmem>>) attributes {dimension_semantics = [#tpu.dimension_semantics<parallel>], iteration_bounds = array<i64: 2>, scalar_prefetch = 0 : i64, scratch_operands = 0 : i64, tpu.core_type = #tpu.core_type<tc>, window_params = [{transform_indices = @transform_0, window_bounds = array<i64: 1, 16, 256>}, {pipeline_mode = #tpu.pipeline_mode<synchronous>, transform_indices = @transform_1, window_bounds = array<i64: 9, 16, 256>}, {pipeline_mode = #tpu.pipeline_mode<synchronous>, transform_indices = @transform_2, window_bounds = array<i64: 16, 144>}, {pipeline_mode = #tpu.pipeline_mode<synchronous>, transform_indices = @transform_3, window_bounds = array<i64: 16, 1>}, {pipeline_mode = #tpu.pipeline_mode<synchronous>, transform_indices = @transform_4, window_bounds = array<i64: 16, 144>}, {pipeline_mode = #tpu.pipeline_mode<synchronous>, transform_indices = @transform_5, window_bounds = array<i64: 16, 1>}, {pipeline_mode = #tpu.pipeline_mode<synchronous>, transform_indices = @transform_6, window_bounds = array<i64: 16, 16>}, {pipeline_mode = #tpu.pipeline_mode<synchronous>, transform_indices = @transform_7, window_bounds = array<i64: 16, 1>}, {transform_indices = @transform_8, window_bounds = array<i64: 1, 16, 256>}]} {
    %c0 = arith.constant 0 : index
    %c0_0 = arith.constant 0 : index
    %c0_1 = arith.constant 0 : index
    %0 = vector.load %arg1[%c0, %c0_0, %c0_1] : memref<1x16x256xf32, #tpu.memory_space<vmem>>, vector<1x16x256xf32>
    %1 = vector.shape_cast %0 : vector<1x16x256xf32> to vector<16x256xf32>
    %c17_i32 = arith.constant 17 : i32
    %2 = tpu.dynamic_rotate %1 by %c17_i32 dim 1 : vector<16x256xf32>, i32 -> vector<16x256xf32>
    %c0_2 = arith.constant 0 : index
    %c0_3 = arith.constant 0 : index
    %c0_4 = arith.constant 0 : index
    %3 = vector.load %arg2[%c0_2, %c0_3, %c0_4] : memref<9x16x256xf32, #tpu.memory_space<vmem>>, vector<1x16x256xf32>
    %4 = vector.shape_cast %3 : vector<1x16x256xf32> to vector<16x256xf32>
    %5 = arith.mulf %2, %4 : vector<16x256xf32>
    %c16_i32 = arith.constant 16 : i32
    %6 = tpu.dynamic_rotate %1 by %c16_i32 dim 1 : vector<16x256xf32>, i32 -> vector<16x256xf32>
    %c1 = arith.constant 1 : index
    %c0_5 = arith.constant 0 : index
    %c0_6 = arith.constant 0 : index
    %7 = vector.load %arg2[%c1, %c0_5, %c0_6] : memref<9x16x256xf32, #tpu.memory_space<vmem>>, vector<1x16x256xf32>
    %8 = vector.shape_cast %7 : vector<1x16x256xf32> to vector<16x256xf32>
    %9 = arith.mulf %6, %8 : vector<16x256xf32>
    %c15_i32 = arith.constant 15 : i32
    %10 = tpu.dynamic_rotate %1 by %c15_i32 dim 1 : vector<16x256xf32>, i32 -> vector<16x256xf32>
    %c2 = arith.constant 2 : index
    %c0_7 = arith.constant 0 : index
    %c0_8 = arith.constant 0 : index
    %11 = vector.load %arg2[%c2, %c0_7, %c0_8] : memref<9x16x256xf32, #tpu.memory_space<vmem>>, vector<1x16x256xf32>
    %12 = vector.shape_cast %11 : vector<1x16x256xf32> to vector<16x256xf32>
    %13 = arith.mulf %10, %12 : vector<16x256xf32>
    %c1_i32 = arith.constant 1 : i32
    %14 = tpu.dynamic_rotate %1 by %c1_i32 dim 1 : vector<16x256xf32>, i32 -> vector<16x256xf32>
    %c3 = arith.constant 3 : index
    %c0_9 = arith.constant 0 : index
    %c0_10 = arith.constant 0 : index
    %15 = vector.load %arg2[%c3, %c0_9, %c0_10] : memref<9x16x256xf32, #tpu.memory_space<vmem>>, vector<1x16x256xf32>
    %16 = vector.shape_cast %15 : vector<1x16x256xf32> to vector<16x256xf32>
    %17 = arith.mulf %14, %16 : vector<16x256xf32>
    %c255_i32 = arith.constant 255 : i32
    %18 = tpu.dynamic_rotate %1 by %c255_i32 dim 1 : vector<16x256xf32>, i32 -> vector<16x256xf32>
    %c5 = arith.constant 5 : index
    %c0_11 = arith.constant 0 : index
    %c0_12 = arith.constant 0 : index
    %19 = vector.load %arg2[%c5, %c0_11, %c0_12] : memref<9x16x256xf32, #tpu.memory_space<vmem>>, vector<1x16x256xf32>
    %20 = vector.shape_cast %19 : vector<1x16x256xf32> to vector<16x256xf32>
    %21 = arith.mulf %18, %20 : vector<16x256xf32>
    %c241_i32 = arith.constant 241 : i32
    %22 = tpu.dynamic_rotate %1 by %c241_i32 dim 1 : vector<16x256xf32>, i32 -> vector<16x256xf32>
    %c6 = arith.constant 6 : index
    %c0_13 = arith.constant 0 : index
    %c0_14 = arith.constant 0 : index
    %23 = vector.load %arg2[%c6, %c0_13, %c0_14] : memref<9x16x256xf32, #tpu.memory_space<vmem>>, vector<1x16x256xf32>
    %24 = vector.shape_cast %23 : vector<1x16x256xf32> to vector<16x256xf32>
    %25 = arith.mulf %22, %24 : vector<16x256xf32>
    %c240_i32 = arith.constant 240 : i32
    %26 = tpu.dynamic_rotate %1 by %c240_i32 dim 1 : vector<16x256xf32>, i32 -> vector<16x256xf32>
    %c7 = arith.constant 7 : index
    %c0_15 = arith.constant 0 : index
    %c0_16 = arith.constant 0 : index
    %27 = vector.load %arg2[%c7, %c0_15, %c0_16] : memref<9x16x256xf32, #tpu.memory_space<vmem>>, vector<1x16x256xf32>
    %28 = vector.shape_cast %27 : vector<1x16x256xf32> to vector<16x256xf32>
    %29 = arith.mulf %26, %28 : vector<16x256xf32>
    %c239_i32 = arith.constant 239 : i32
    %30 = tpu.dynamic_rotate %1 by %c239_i32 dim 1 : vector<16x256xf32>, i32 -> vector<16x256xf32>
    %c8 = arith.constant 8 : index
    %c0_17 = arith.constant 0 : index
    %c0_18 = arith.constant 0 : index
    %31 = vector.load %arg2[%c8, %c0_17, %c0_18] : memref<9x16x256xf32, #tpu.memory_space<vmem>>, vector<1x16x256xf32>
    %32 = vector.shape_cast %31 : vector<1x16x256xf32> to vector<16x256xf32>
    %33 = arith.mulf %30, %32 : vector<16x256xf32>
    %34 = tpu.concatenate %5, %9, %13, %17, %1, %21, %25, %29, %33 in 0 : vector<16x256xf32>, vector<16x256xf32>, vector<16x256xf32>, vector<16x256xf32>, vector<16x256xf32>, vector<16x256xf32>, vector<16x256xf32>, vector<16x256xf32>, vector<16x256xf32> -> vector<144x256xf32>
    %c0_19 = arith.constant 0 : index
    %c0_20 = arith.constant 0 : index
    %35 = vector.load %arg3[%c0_19, %c0_20] : memref<16x144xf32, #tpu.memory_space<vmem>>, vector<16x144xf32>
    %cst = arith.constant dense<0.000000e+00> : vector<16x256xf32>
    %36 = tpu.matmul %35, %34, %cst {dimension_numbers = #tpu.dot_dimension_numbers<[1], [0], [0], [1], [0, 0, 1, 1], [], []>} : vector<16x144xf32>, vector<144x256xf32>, vector<16x256xf32> -> vector<16x256xf32>
    %c0_21 = arith.constant 0 : index
    %c0_22 = arith.constant 0 : index
    %37 = vector.load %arg4[%c0_21, %c0_22] : memref<16x1xf32, #tpu.memory_space<vmem>>, vector<16x1xf32>
    %38 = vector.broadcast %37 : vector<16x1xf32> to vector<16x256xf32>
    %39 = arith.addf %36, %38 : vector<16x256xf32>
    %cst_23 = arith.constant 0.000000e+00 : f32
    %40 = vector.broadcast %cst_23 : f32 to vector<16x256xf32>
    %41 = arith.maximumf %39, %40 : vector<16x256xf32>
    %c17_i32_24 = arith.constant 17 : i32
    %42 = tpu.dynamic_rotate %41 by %c17_i32_24 dim 1 : vector<16x256xf32>, i32 -> vector<16x256xf32>
    %c0_25 = arith.constant 0 : index
    %c0_26 = arith.constant 0 : index
    %c0_27 = arith.constant 0 : index
    %43 = vector.load %arg2[%c0_25, %c0_26, %c0_27] : memref<9x16x256xf32, #tpu.memory_space<vmem>>, vector<1x16x256xf32>
    %44 = vector.shape_cast %43 : vector<1x16x256xf32> to vector<16x256xf32>
    %45 = arith.mulf %42, %44 : vector<16x256xf32>
    %c16_i32_28 = arith.constant 16 : i32
    %46 = tpu.dynamic_rotate %41 by %c16_i32_28 dim 1 : vector<16x256xf32>, i32 -> vector<16x256xf32>
    %c1_29 = arith.constant 1 : index
    %c0_30 = arith.constant 0 : index
    %c0_31 = arith.constant 0 : index
    %47 = vector.load %arg2[%c1_29, %c0_30, %c0_31] : memref<9x16x256xf32, #tpu.memory_space<vmem>>, vector<1x16x256xf32>
    %48 = vector.shape_cast %47 : vector<1x16x256xf32> to vector<16x256xf32>
    %49 = arith.mulf %46, %48 : vector<16x256xf32>
    %c15_i32_32 = arith.constant 15 : i32
    %50 = tpu.dynamic_rotate %41 by %c15_i32_32 dim 1 : vector<16x256xf32>, i32 -> vector<16x256xf32>
    %c2_33 = arith.constant 2 : index
    %c0_34 = arith.constant 0 : index
    %c0_35 = arith.constant 0 : index
    %51 = vector.load %arg2[%c2_33, %c0_34, %c0_35] : memref<9x16x256xf32, #tpu.memory_space<vmem>>, vector<1x16x256xf32>
    %52 = vector.shape_cast %51 : vector<1x16x256xf32> to vector<16x256xf32>
    %53 = arith.mulf %50, %52 : vector<16x256xf32>
    %c1_i32_36 = arith.constant 1 : i32
    %54 = tpu.dynamic_rotate %41 by %c1_i32_36 dim 1 : vector<16x256xf32>, i32 -> vector<16x256xf32>
    %c3_37 = arith.constant 3 : index
    %c0_38 = arith.constant 0 : index
    %c0_39 = arith.constant 0 : index
    %55 = vector.load %arg2[%c3_37, %c0_38, %c0_39] : memref<9x16x256xf32, #tpu.memory_space<vmem>>, vector<1x16x256xf32>
    %56 = vector.shape_cast %55 : vector<1x16x256xf32> to vector<16x256xf32>
    %57 = arith.mulf %54, %56 : vector<16x256xf32>
    %c255_i32_40 = arith.constant 255 : i32
    %58 = tpu.dynamic_rotate %41 by %c255_i32_40 dim 1 : vector<16x256xf32>, i32 -> vector<16x256xf32>
    %c5_41 = arith.constant 5 : index
    %c0_42 = arith.constant 0 : index
    %c0_43 = arith.constant 0 : index
    %59 = vector.load %arg2[%c5_41, %c0_42, %c0_43] : memref<9x16x256xf32, #tpu.memory_space<vmem>>, vector<1x16x256xf32>
    %60 = vector.shape_cast %59 : vector<1x16x256xf32> to vector<16x256xf32>
    %61 = arith.mulf %58, %60 : vector<16x256xf32>
    %c241_i32_44 = arith.constant 241 : i32
    %62 = tpu.dynamic_rotate %41 by %c241_i32_44 dim 1 : vector<16x256xf32>, i32 -> vector<16x256xf32>
    %c6_45 = arith.constant 6 : index
    %c0_46 = arith.constant 0 : index
    %c0_47 = arith.constant 0 : index
    %63 = vector.load %arg2[%c6_45, %c0_46, %c0_47] : memref<9x16x256xf32, #tpu.memory_space<vmem>>, vector<1x16x256xf32>
    %64 = vector.shape_cast %63 : vector<1x16x256xf32> to vector<16x256xf32>
    %65 = arith.mulf %62, %64 : vector<16x256xf32>
    %c240_i32_48 = arith.constant 240 : i32
    %66 = tpu.dynamic_rotate %41 by %c240_i32_48 dim 1 : vector<16x256xf32>, i32 -> vector<16x256xf32>
    %c7_49 = arith.constant 7 : index
    %c0_50 = arith.constant 0 : index
    %c0_51 = arith.constant 0 : index
    %67 = vector.load %arg2[%c7_49, %c0_50, %c0_51] : memref<9x16x256xf32, #tpu.memory_space<vmem>>, vector<1x16x256xf32>
    %68 = vector.shape_cast %67 : vector<1x16x256xf32> to vector<16x256xf32>
    %69 = arith.mulf %66, %68 : vector<16x256xf32>
    %c239_i32_52 = arith.constant 239 : i32
    %70 = tpu.dynamic_rotate %41 by %c239_i32_52 dim 1 : vector<16x256xf32>, i32 -> vector<16x256xf32>
    %c8_53 = arith.constant 8 : index
    %c0_54 = arith.constant 0 : index
    %c0_55 = arith.constant 0 : index
    %71 = vector.load %arg2[%c8_53, %c0_54, %c0_55] : memref<9x16x256xf32, #tpu.memory_space<vmem>>, vector<1x16x256xf32>
    %72 = vector.shape_cast %71 : vector<1x16x256xf32> to vector<16x256xf32>
    %73 = arith.mulf %70, %72 : vector<16x256xf32>
    %74 = tpu.concatenate %45, %49, %53, %57, %41, %61, %65, %69, %73 in 0 : vector<16x256xf32>, vector<16x256xf32>, vector<16x256xf32>, vector<16x256xf32>, vector<16x256xf32>, vector<16x256xf32>, vector<16x256xf32>, vector<16x256xf32>, vector<16x256xf32> -> vector<144x256xf32>
    %c0_56 = arith.constant 0 : index
    %c0_57 = arith.constant 0 : index
    %75 = vector.load %arg5[%c0_56, %c0_57] : memref<16x144xf32, #tpu.memory_space<vmem>>, vector<16x144xf32>
    %cst_58 = arith.constant dense<0.000000e+00> : vector<16x256xf32>
    %76 = tpu.matmul %75, %74, %cst_58 {dimension_numbers = #tpu.dot_dimension_numbers<[1], [0], [0], [1], [0, 0, 1, 1], [], []>} : vector<16x144xf32>, vector<144x256xf32>, vector<16x256xf32> -> vector<16x256xf32>
    %c0_59 = arith.constant 0 : index
    %c0_60 = arith.constant 0 : index
    %77 = vector.load %arg6[%c0_59, %c0_60] : memref<16x1xf32, #tpu.memory_space<vmem>>, vector<16x1xf32>
    %78 = vector.broadcast %77 : vector<16x1xf32> to vector<16x256xf32>
    %79 = arith.addf %76, %78 : vector<16x256xf32>
    %cst_61 = arith.constant 0.000000e+00 : f32
    %80 = vector.broadcast %cst_61 : f32 to vector<16x256xf32>
    %81 = arith.maximumf %79, %80 : vector<16x256xf32>
    %c0_62 = arith.constant 0 : index
    %c0_63 = arith.constant 0 : index
    %82 = vector.load %arg7[%c0_62, %c0_63] : memref<16x16xf32, #tpu.memory_space<vmem>>, vector<16x16xf32>
    %cst_64 = arith.constant dense<0.000000e+00> : vector<16x256xf32>
    %83 = tpu.matmul %82, %81, %cst_64 {dimension_numbers = #tpu.dot_dimension_numbers<[1], [0], [0], [1], [0, 0, 1, 1], [], []>} : vector<16x16xf32>, vector<16x256xf32>, vector<16x256xf32> -> vector<16x256xf32>
    %c0_65 = arith.constant 0 : index
    %c0_66 = arith.constant 0 : index
    %84 = vector.load %arg8[%c0_65, %c0_66] : memref<16x1xf32, #tpu.memory_space<vmem>>, vector<16x1xf32>
    %85 = vector.broadcast %84 : vector<16x1xf32> to vector<16x256xf32>
    %86 = arith.addf %83, %85 : vector<16x256xf32>
    %87 = arith.addf %86, %1 : vector<16x256xf32>
    %cst_67 = arith.constant 0.000000e+00 : f32
    %88 = vector.broadcast %cst_67 : f32 to vector<16x256xf32>
    %89 = arith.maximumf %87, %88 : vector<16x256xf32>
    %c0_68 = arith.constant 0 : index
    %c0_69 = arith.constant 0 : index
    %c0_70 = arith.constant 0 : index
    %90 = vector.load %arg9[%c0_68, %c0_69, %c0_70] : memref<1x16x256xf32, #tpu.memory_space<vmem>>, vector<1x16x256xf32>
    %91 = vector.shape_cast %90 : vector<1x16x256xf32> to vector<16x256xf32>
    %92 = vector.shape_cast %89 : vector<16x256xf32> to vector<1x16x256xf32>
    tpu.vector_store %arg9[%c0_68, %c0_69, %c0_70], %92 {strides = array<i32>} : memref<1x16x256xf32, #tpu.memory_space<vmem>>, vector<1x16x256xf32>,
    return
  }
  func.func @transform_0(%arg0: i32) -> (i32, i32, i32) {
    %c0_i32 = arith.constant 0 : i32
    %c0_i32_0 = arith.constant 0 : i32
    %c0_i32_1 = arith.constant 0 : i32
    return %arg0, %c0_i32, %c0_i32_0 : i32, i32, i32
  }
  func.func @transform_1(%arg0: i32) -> (i32, i32, i32) {
    %c0_i32 = arith.constant 0 : i32
    %c0_i32_0 = arith.constant 0 : i32
    %c0_i32_1 = arith.constant 0 : i32
    %c0_i32_2 = arith.constant 0 : i32
    return %c0_i32, %c0_i32_0, %c0_i32_1 : i32, i32, i32
  }
  func.func @transform_2(%arg0: i32) -> (i32, i32) {
    %c0_i32 = arith.constant 0 : i32
    %c0_i32_0 = arith.constant 0 : i32
    %c0_i32_1 = arith.constant 0 : i32
    return %c0_i32, %c0_i32_0 : i32, i32
  }
  func.func @transform_3(%arg0: i32) -> (i32, i32) {
    %c0_i32 = arith.constant 0 : i32
    %c0_i32_0 = arith.constant 0 : i32
    %c0_i32_1 = arith.constant 0 : i32
    return %c0_i32, %c0_i32_0 : i32, i32
  }
  func.func @transform_4(%arg0: i32) -> (i32, i32) {
    %c0_i32 = arith.constant 0 : i32
    %c0_i32_0 = arith.constant 0 : i32
    %c0_i32_1 = arith.constant 0 : i32
    return %c0_i32, %c0_i32_0 : i32, i32
  }
  func.func @transform_5(%arg0: i32) -> (i32, i32) {
    %c0_i32 = arith.constant 0 : i32
    %c0_i32_0 = arith.constant 0 : i32
    %c0_i32_1 = arith.constant 0 : i32
    return %c0_i32, %c0_i32_0 : i32, i32
  }
  func.func @transform_6(%arg0: i32) -> (i32, i32) {
    %c0_i32 = arith.constant 0 : i32
    %c0_i32_0 = arith.constant 0 : i32
    %c0_i32_1 = arith.constant 0 : i32
    return %c0_i32, %c0_i32_0 : i32, i32
  }
  func.func @transform_7(%arg0: i32) -> (i32, i32) {
    %c0_i32 = arith.constant 0 : i32
    %c0_i32_0 = arith.constant 0 : i32
    %c0_i32_1 = arith.constant 0 : i32
    return %c0_i32, %c0_i32_0 : i32, i32
  }
  func.func @transform_8(%arg0: i32) -> (i32, i32, i32) {
    %c0_i32 = arith.constant 0 : i32
    %c0_i32_0 = arith.constant 0 : i32
    %c0_i32_1 = arith.constant 0 : i32
    return %arg0, %c0_i32, %c0_i32_0 : i32, i32, i32
  }
}

</mosaic_0001>

<llo_original>
// kernel: eresidual_block.1
$region0: #{eresidual_block.1}
  #allocation0 [shape = 'u32[]', space=smem, size = 0x4, offset = 0x4, fixed_abs, tag = 'smem constant byte address 0x4 - core index']
  #allocation1 [shape = 'u32[144,128]{1,0:T(1,128)}', space=vmem, size = 0x12000, scoped, tag = 'internal scratch']
  %s0 = inlined_call_operand.vmem [shape: f32[2,16,256], index: 0, kind: input, shape index: {}]
  %s1 = inlined_call_operand.vmem [shape: f32[9,16,256], index: 1, kind: input, shape index: {}]
  %s2 = inlined_call_operand.vmem [shape: f32[16,144], index: 2, kind: input, shape index: {}]
  %s3 = inlined_call_operand.vmem [shape: f32[16,1], index: 3, kind: input, shape index: {}]
  %s4 = inlined_call_operand.vmem [shape: f32[16,144], index: 4, kind: input, shape index: {}]
  %s5 = inlined_call_operand.vmem [shape: f32[16,1], index: 5, kind: input, shape index: {}]
  %s6 = inlined_call_operand.vmem [shape: f32[16,16], index: 6, kind: input, shape index: {}]
  %s7 = inlined_call_operand.vmem [shape: f32[16,1], index: 7, kind: input, shape index: {}]
  %s8 = inlined_call_operand.vmem [shape: f32[2,16,256], index: 8, kind: output, shape index: {}]
  %s9 = sld [smem:[#allocation0]]
  $region65: #{eresidual_block.1} parent=0
    _
  %s11 = ssub.s32 1, %s9
  %s12 = scalar_select 0, %s11, %s9
  loop: start=0, step=1, limit=4
  $region2: #{eresidual_block.1} parent=0 // loop_pre_header
    _
  $region3: #{eresidual_block.1} parent=0 // loop_header
    %s14 = sphi 0, %s18
    %p15 = scmp.ge.s32.totalorder %s14, 4
    %s24 = sphi 0, %s26
    %s27 = sphi 0, %s24
    %s28 = sphi 0, %s27
    %s44 = sphi 0, %s28
    %s48 = sphi 0, %s48
    %s50 = sphi 0, %s48
    %s51 = sphi 0, %s50
    %s65 = sphi 0, %s51
    %s69 = sphi 0, %s69
    %s71 = sphi 0, %s69
    %s72 = sphi 0, %s71
    %s86 = sphi 0, %s72
    %s90 = sphi 0, %s90
    %s92 = sphi 0, %s90
    %s93 = sphi 0, %s92
    %s107 = sphi 0, %s93
    %s111 = sphi 0, %s111
    %s113 = sphi 0, %s111
    %s114 = sphi 0, %s113
    %s128 = sphi 0, %s114
    %s132 = sphi 0, %s132
    %s134 = sphi 0, %s132
    %s135 = sphi 0, %s134
    %s149 = sphi 0, %s135
    %s153 = sphi 0, %s153
    %s155 = sphi 0, %s153
    %s156 = sphi 0, %s155
    %s170 = sphi 0, %s156
    %s174 = sphi 0, %s174
    %s176 = sphi 0, %s174
    %s177 = sphi 0, %s176
    %s191 = sphi 0, %s177
    %s197 = sphi 0, %s199
    %s200 = sphi 0, %s197
    %s201 = sphi 0, %s200
    %s217 = sphi 0, %s201
  $region4: #{eresidual_block.1} parent=0 // loop_header_branch
    %17 = sbr.rel (%p15) target = $region8
  $region5: #{eresidual_block.1} parent=0 // loop_body
    %s19 = ssub.s32 %s14, 1
    %s20 = ssub.s32 %s14, 2
    %s21 = sadd.s32 %s14, 1
    %s22 = ssub.s32 %s14, %s21
    %p23 = scmp.eq.s32.totalorder %s22, 0
    %s25 = sadd.s32 %s24, 1
    %s26 = scalar_select %p23, %s24, %s25
    %p29 = pneg %p23
    %p30 = scmp.eq.s32.totalorder %s14, 1
    %p31 = por %p29, %p30
    %p32 = scmp.ne.s32.totalorder %s24, %s27
    %p33 = scmp.eq.s32.totalorder %s14, 0
    %p34 = por %p32, %p33
    %p35 = scmp.ne.s32.totalorder %s24, %s27
    %p36 = scmp.eq.s32.totalorder %s19, 1
    %p37 = por %p35, %p36
    %p38 = scmp.ne.s32.totalorder %s27, %s28
    %p39 = scmp.eq.s32.totalorder %s19, 0
    %p40 = por %p38, %p39
    %p41 = scmp.ne.s32.totalorder %s27, %s28
    %p42 = scmp.eq.s32.totalorder %s20, 1
    %p43 = por %p41, %p42
    %p45 = scmp.ne.s32.totalorder %s28, %s44
    %p46 = scmp.eq.s32.totalorder %s20, 0
    %p47 = por %p45, %p46
    %s49 = sadd.s32 %s48, 1
    %p52 = scmp.eq.s32.totalorder %s14, 1
    %p53 = scmp.ne.s32.totalorder %s48, %s50
    %p54 = scmp.eq.s32.totalorder %s14, 0
    %p55 = por %p53, %p54
    %p56 = scmp.ne.s32.totalorder %s48, %s50
    %p57 = scmp.eq.s32.totalorder %s19, 1
    %p58 = por %p56, %p57
    %p59 = scmp.ne.s32.totalorder %s50, %s51
    %p60 = scmp.eq.s32.totalorder %s19, 0
    %p61 = por %p59, %p60
    %p62 = scmp.ne.s32.totalorder %s50, %s51
    %p63 = scmp.eq.s32.totalorder %s20, 1
    %p64 = por %p62, %p63
    %p66 = scmp.ne.s32.totalorder %s51, %s65
    %p67 = scmp.eq.s32.totalorder %s20, 0
    %p68 = por %p66, %p67
    %s70 = sadd.s32 %s69, 1
    %p73 = scmp.eq.s32.totalorder %s14, 1
    %p74 = scmp.ne.s32.totalorder %s69, %s71
    %p75 = scmp.eq.s32.totalorder %s14, 0
    %p76 = por %p74, %p75
    %p77 = scmp.ne.s32.totalorder %s69, %s71
    %p78 = scmp.eq.s32.totalorder %s19, 1
    %p79 = por %p77, %p78
    %p80 = scmp.ne.s32.totalorder %s71, %s72
    %p81 = scmp.eq.s32.totalorder %s19, 0
    %p82 = por %p80, %p81
    %p83 = scmp.ne.s32.totalorder %s71, %s72
    %p84 = scmp.eq.s32.totalorder %s20, 1
    %p85 = por %p83, %p84
    %p87 = scmp.ne.s32.totalorder %s72, %s86
    %p88 = scmp.eq.s32.totalorder %s20, 0
    %p89 = por %p87, %p88
    %s91 = sadd.s32 %s90, 1
    %p94 = scmp.eq.s32.totalorder %s14, 1
    %p95 = scmp.ne.s32.totalorder %s90, %s92
    %p96 = scmp.eq.s32.totalorder %s14, 0
    %p97 = por %p95, %p96
    %p98 = scmp.ne.s32.totalorder %s90, %s92
    %p99 = scmp.eq.s32.totalorder %s19, 1
    %p100 = por %p98, %p99
    %p101 = scmp.ne.s32.totalorder %s92, %s93
    %p102 = scmp.eq.s32.totalorder %s19, 0
    %p103 = por %p101, %p102
    %p104 = scmp.ne.s32.totalorder %s92, %s93
    %p105 = scmp.eq.s32.totalorder %s20, 1
    %p106 = por %p104, %p105
    %p108 = scmp.ne.s32.totalorder %s93, %s107
    %p109 = scmp.eq.s32.totalorder %s20, 0
    %p110 = por %p108, %p109
    %s112 = sadd.s32 %s111, 1
    %p115 = scmp.eq.s32.totalorder %s14, 1
    %p116 = scmp.ne.s32.totalorder %s111, %s113
    %p117 = scmp.eq.s32.totalorder %s14, 0
    %p118 = por %p116, %p117
    %p119 = scmp.ne.s32.totalorder %s111, %s113
    %p120 = scmp.eq.s32.totalorder %s19, 1
    %p121 = por %p119, %p120
    %p122 = scmp.ne.s32.totalorder %s113, %s114
    %p123 = scmp.eq.s32.totalorder %s19, 0
    %p124 = por %p122, %p123
    %p125 = scmp.ne.s32.totalorder %s113, %s114
    %p126 = scmp.eq.s32.totalorder %s20, 1
    %p127 = por %p125, %p126
    %p129 = scmp.ne.s32.totalorder %s114, %s128
    %p130 = scmp.eq.s32.totalorder %s20, 0
    %p131 = por %p129, %p130
    %s133 = sadd.s32 %s132, 1
    %p136 = scmp.eq.s32.totalorder %s14, 1
    %p137 = scmp.ne.s32.totalorder %s132, %s134
    %p138 = scmp.eq.s32.totalorder %s14, 0
    %p139 = por %p137, %p138
    %p140 = scmp.ne.s32.totalorder %s132, %s134
    %p141 = scmp.eq.s32.totalorder %s19, 1
    %p142 = por %p140, %p141
    %p143 = scmp.ne.s32.totalorder %s134, %s135
    %p144 = scmp.eq.s32.totalorder %s19, 0
    %p145 = por %p143, %p144
    %p146 = scmp.ne.s32.totalorder %s134, %s135
    %p147 = scmp.eq.s32.totalorder %s20, 1
    %p148 = por %p146, %p147
    %p150 = scmp.ne.s32.totalorder %s135, %s149
    %p151 = scmp.eq.s32.totalorder %s20, 0
    %p152 = por %p150, %p151
    %s154 = sadd.s32 %s153, 1
    %p157 = scmp.eq.s32.totalorder %s14, 1
    %p158 = scmp.ne.s32.totalorder %s153, %s155
    %p159 = scmp.eq.s32.totalorder %s14, 0
    %p160 = por %p158, %p159
    %p161 = scmp.ne.s32.totalorder %s153, %s155
    %p162 = scmp.eq.s32.totalorder %s19, 1
    %p163 = por %p161, %p162
    %p164 = scmp.ne.s32.totalorder %s155, %s156
    %p165 = scmp.eq.s32.totalorder %s19, 0
    %p166 = por %p164, %p165
    %p167 = scmp.ne.s32.totalorder %s155, %s156
    %p168 = scmp.eq.s32.totalorder %s20, 1
    %p169 = por %p167, %p168
    %p171 = scmp.ne.s32.totalorder %s156, %s170
    %p172 = scmp.eq.s32.totalorder %s20, 0
    %p173 = por %p171, %p172
    %s175 = sadd.s32 %s174, 1
    %p178 = scmp.eq.s32.totalorder %s14, 1
    %p179 = scmp.ne.s32.totalorder %s174, %s176
    %p180 = scmp.eq.s32.totalorder %s14, 0
    %p181 = por %p179, %p180
    %p182 = scmp.ne.s32.totalorder %s174, %s176
    %p183 = scmp.eq.s32.totalorder %s19, 1
    %p184 = por %p182, %p183
    %p185 = scmp.ne.s32.totalorder %s176, %s177
    %p186 = scmp.eq.s32.totalorder %s19, 0
    %p187 = por %p185, %p186
    %p188 = scmp.ne.s32.totalorder %s176, %s177
    %p189 = scmp.eq.s32.totalorder %s20, 1
    %p190 = por %p188, %p189
    %p192 = scmp.ne.s32.totalorder %s177, %s191
    %p193 = scmp.eq.s32.totalorder %s20, 0
    %p194 = por %p192, %p193
    %s195 = ssub.s32 %s14, %s21
    %p196 = scmp.eq.s32.totalorder %s195, 0
    %s198 = sadd.s32 %s197, 1
    %s199 = scalar_select %p196, %s197, %s198
    %p202 = pneg %p196
    %p203 = scmp.eq.s32.totalorder %s14, 1
    %p204 = por %p202, %p203
    %p205 = scmp.ne.s32.totalorder %s197, %s200
    %p206 = scmp.eq.s32.totalorder %s14, 0
    %p207 = por %p205, %p206
    %p208 = scmp.ne.s32.totalorder %s197, %s200
    %p209 = scmp.eq.s32.totalorder %s19, 1
    %p210 = por %p208, %p209
    %p211 = scmp.ne.s32.totalorder %s200, %s201
    %p212 = scmp.eq.s32.totalorder %s19, 0
    %p213 = por %p211, %p212
    %p214 = scmp.ne.s32.totalorder %s200, %s201
    %p215 = scmp.eq.s32.totalorder %s20, 1
    %p216 = por %p214, %p215
    %p218 = scmp.ne.s32.totalorder %s201, %s217
    %p219 = scmp.eq.s32.totalorder %s20, 0
    %p220 = por %p218, %p219
    %p221 = scmp.le.s32.totalorder 1, %s14
    %p222 = scmp.lt.s32.totalorder %s14, 3
    %p223 = pnand %p221, %p222
    %p224 = pneg %p223
    // Predicated region
    $region9: #{eresidual_block.1} parent=5 // pred_check
      _
    $region10: #{eresidual_block.1} parent=5 // pred_check_branch
      %226 = sbr.rel (%p223) target = $region12
    $region11: #{eresidual_block.1} parent=5 // pred_region
      %s227 = ssub.s32 %s14, 1
      // Predicated region
      $region13: #{eresidual_block.1} parent=11 // pred_check
        %p228 = pneg %p61
      $region14: #{eresidual_block.1} parent=11 // pred_check_branch
        %230 = sbr.rel (%p228) target = $region16
      $region15: #{eresidual_block.1} parent=11 // pred_region
        _
      $region16: #{eresidual_block.1} parent=11 // pred_fallthru
        _
      // Predicated region
      $region17: #{eresidual_block.1} parent=11 // pred_check
        %p231 = pneg %p82
      $region18: #{eresidual_block.1} parent=11 // pred_check_branch
        %233 = sbr.rel (%p231) target = $region20
      $region19: #{eresidual_block.1} parent=11 // pred_region
        _
      $region20: #{eresidual_block.1} parent=11 // pred_fallthru
        _
      // Predicated region
      $region21: #{eresidual_block.1} parent=11 // pred_check
        %p234 = pneg %p103
      $region22: #{eresidual_block.1} parent=11 // pred_check_branch
        %236 = sbr.rel (%p234) target = $region24
      $region23: #{eresidual_block.1} parent=11 // pred_region
        _
      $region24: #{eresidual_block.1} parent=11 // pred_fallthru
        _
      // Predicated region
      $region25: #{eresidual_block.1} parent=11 // pred_check
        %p237 = pneg %p124
      $region26: #{eresidual_block.1} parent=11 // pred_check_branch
        %239 = sbr.rel (%p237) target = $region28
      $region27: #{eresidual_block.1} parent=11 // pred_region
        _
      $region28: #{eresidual_block.1} parent=11 // pred_fallthru
        _
      // Predicated region
      $region29: #{eresidual_block.1} parent=11 // pred_check
        %p240 = pneg %p145
      $region30: #{eresidual_block.1} parent=11 // pred_check_branch
        %242 = sbr.rel (%p240) target = $region32
      $region31: #{eresidual_block.1} parent=11 // pred_region
        _
      $region32: #{eresidual_block.1} parent=11 // pred_fallthru
        _
      // Predicated region
      $region33: #{eresidual_block.1} parent=11 // pred_check
        %p243 = pneg %p166
      $region34: #{eresidual_block.1} parent=11 // pred_check_branch
        %245 = sbr.rel (%p243) target = $region36
      $region35: #{eresidual_block.1} parent=11 // pred_region
        _
      $region36: #{eresidual_block.1} parent=11 // pred_fallthru
        _
      // Predicated region
      $region37: #{eresidual_block.1} parent=11 // pred_check
        %p246 = pneg %p187
      $region38: #{eresidual_block.1} parent=11 // pred_check_branch
        %248 = sbr.rel (%p246) target = $region40
      $region39: #{eresidual_block.1} parent=11 // pred_region
        _
      $region40: #{eresidual_block.1} parent=11 // pred_fallthru
        _
    $region12: #{eresidual_block.1} parent=5 // pred_fallthru
      _
    %p249 = scmp.lt.s32.totalorder %s14, 2
    // Predicated region
    $region41: #{eresidual_block.1} parent=5 // pred_check
      %p250 = pneg %p249
    $region42: #{eresidual_block.1} parent=5 // pred_check_branch
      %252 = sbr.rel (%p250) target = $region44
    $region43: #{eresidual_block.1} parent=5 // pred_region
      // Predicated region
      $region45: #{eresidual_block.1} parent=43 // pred_check
        %p253 = pneg %p34
      $region46: #{eresidual_block.1} parent=43 // pred_check_branch
        %255 = sbr.rel (%p253) target = $region48
      $region47: #{eresidual_block.1} parent=43 // pred_region
        %p256 = scmp.lt.s32.totalorder %s14, 1
        %s257 = scalar_select %p256, %s14, 1
        %s258 = smul.addr %s257, 4
        %s259 = smul.addr %s258, 8
        %s260 = scalar_lea.vmem %s0, %s259
      $region48: #{eresidual_block.1} parent=43 // pred_fallthru
        _
    $region44: #{eresidual_block.1} parent=5 // pred_fallthru
      _
    %p261 = scmp.le.s32.totalorder 1, %s14
    %p262 = scmp.lt.s32.totalorder %s14, 3
    %p263 = pnand %p261, %p262
    %p264 = pneg %p263
    // Predicated region
    $region49: #{eresidual_block.1} parent=5 // pred_check
      _
    $region50: #{eresidual_block.1} parent=5 // pred_check_branch
      %266 = sbr.rel (%p263) target = $region52
    $region51: #{eresidual_block.1} parent=5 // pred_region
      %s267 = ssub.s32 %s14, 1
      %p268 = scmp.lt.s32.totalorder %s19, 1
      %s269 = scalar_select %p268, %s19, 1
      %s270 = smul.addr %s269, 4
      %s271 = smul.addr %s270, 8
      %s272 = scalar_lea.vmem %s0, %s271
      %p273 = pneg %p40
      %p274 = pneg %p37
      %p275 = pneg %p61
      %p276 = pneg %p58
      %p277 = pneg %p82
      %p278 = pneg %p79
      %p279 = pneg %p103
      %p280 = pneg %p100
      %p281 = pneg %p124
      %p282 = pneg %p121
      %p283 = pneg %p145
      %p284 = pneg %p142
      %p285 = pneg %p166
      %p286 = pneg %p163
      %p287 = pneg %p187
      %p288 = pneg %p184
      %p289 = pneg %p213
      %p290 = pneg %p210
      %p291 = scmp.lt.s32.totalorder %s19, 1
      %s292 = scalar_select %p291, %s19, 1
      %s293 = smul.addr %s292, 4
      %s294 = smul.addr %s293, 8
      %s295 = scalar_lea.vmem %s8, %s294
      %p296 = scmp.lt.s32.totalorder %s19, 1
      %s297 = scalar_select %p296, %s19, 1
      %s298 = smul.addr %s297, 4
      %s299 = smul.addr %s298, 8
      %s300 = scalar_lea.vmem %s0, %s299
      %p301 = scmp.lt.s32.totalorder %s19, 1
      %s302 = scalar_select %p301, %s19, 1
      %s303 = smul.addr %s302, 4
      %s304 = smul.addr %s303, 8
      %s305 = scalar_lea.vmem %s8, %s304
      %v306 = vld [vmem:[%s300] sm:$0xff]
      %v307 = vld [vmem:[%s300 + $0x8] sm:$0xff]
      %v308 = vld [vmem:[%s300 + $0x10] sm:$0xff]
      %v309 = vld [vmem:[%s300 + $0x18] sm:$0xff]
      %310 = vrot.lane.b32.xlu0 %v306, 17
      %v311 = vpop.permute.xlu0 %310
      %312 = vrot.lane.b32.xlu0 %v308, 17
      %v313 = vpop.permute.xlu0 %312
      %314 = vrot.lane.b32.xlu0 %v307, 17
      %v315 = vpop.permute.xlu0 %314
      %316 = vrot.lane.b32.xlu0 %v309, 17
      %v317 = vpop.permute.xlu0 %316
      %v318 = vlaneseq
      %v319 = vand.u32 %v318, 127
      %vm320 = vcmp.lt.s32.totalorder %v319, 17
      %v321 = vsel %vm320, %v311, %v315
      %v322 = vsel %vm320, %v313, %v317
      %v323 = vsel %vm320, %v315, %v311
      %v324 = vsel %vm320, %v317, %v313
      %v325 = vld [vmem:[%s1] sm:$0xff]
      %v326 = vld [vmem:[%s1 + $0x8] sm:$0xff]
      %v327 = vld [vmem:[%s1 + $0x10] sm:$0xff]
      %v328 = vld [vmem:[%s1 + $0x18] sm:$0xff]
      %v329 = vmul.f32 %v323, %v325
      %v330 = vmul.f32 %v321, %v326
      %v331 = vmul.f32 %v324, %v327
      %v332 = vmul.f32 %v322, %v328
      %333 = vrot.lane.b32.xlu0 %v306, 16
      %v334 = vpop.permute.xlu0 %333
      %335 = vrot.lane.b32.xlu0 %v308, 16
      %v336 = vpop.permute.xlu0 %335
      %337 = vrot.lane.b32.xlu0 %v307, 16
      %v338 = vpop.permute.xlu0 %337
      %339 = vrot.lane.b32.xlu0 %v309, 16
      %v340 = vpop.permute.xlu0 %339
      %vm341 = vcmp.lt.s32.totalorder %v319, 16
      %v342 = vsel %vm341, %v334, %v338
      %v343 = vsel %vm341, %v336, %v340
      %v344 = vsel %vm341, %v338, %v334
      %v345 = vsel %vm341, %v340, %v336
      %s346 = scalar_lea.vmem %s1, 32
      %v347 = vld [vmem:[%s346] sm:$0xff]
      %v348 = vld [vmem:[%s346 + $0x8] sm:$0xff]
      %v349 = vld [vmem:[%s346 + $0x10] sm:$0xff]
      %v350 = vld [vmem:[%s346 + $0x18] sm:$0xff]
      %v351 = vmul.f32 %v344, %v347
      %v352 = vmul.f32 %v342, %v348
      %v353 = vmul.f32 %v345, %v349
      %v354 = vmul.f32 %v343, %v350
      %355 = vrot.lane.b32.xlu0 %v306, 15
      %v356 = vpop.permute.xlu0 %355
      %357 = vrot.lane.b32.xlu0 %v308, 15
      %v358 = vpop.permute.xlu0 %357
      %359 = vrot.lane.b32.xlu0 %v307, 15
      %v360 = vpop.permute.xlu0 %359
      %361 = vrot.lane.b32.xlu0 %v309, 15
      %v362 = vpop.permute.xlu0 %361
      %vm363 = vcmp.lt.s32.totalorder %v319, 15
      %v364 = vsel %vm363, %v356, %v360
      %v365 = vsel %vm363, %v358, %v362
      %v366 = vsel %vm363, %v360, %v356
      %v367 = vsel %vm363, %v362, %v358
      %s368 = scalar_lea.vmem %s1, 64
      %v369 = vld [vmem:[%s368] sm:$0xff]
      %v370 = vld [vmem:[%s368 + $0x8] sm:$0xff]
      %v371 = vld [vmem:[%s368 + $0x10] sm:$0xff]
      %v372 = vld [vmem:[%s368 + $0x18] sm:$0xff]
      %v373 = vmul.f32 %v366, %v369
      %v374 = vmul.f32 %v364, %v370
      %v375 = vmul.f32 %v367, %v371
      %v376 = vmul.f32 %v365, %v372
      %377 = vrot.lane.b32.xlu0 %v306, 1
      %v378 = vpop.permute.xlu0 %377
      %379 = vrot.lane.b32.xlu0 %v308, 1
      %v380 = vpop.permute.xlu0 %379
      %381 = vrot.lane.b32.xlu0 %v307, 1
      %v382 = vpop.permute.xlu0 %381
      %383 = vrot.lane.b32.xlu0 %v309, 1
      %v384 = vpop.permute.xlu0 %383
      %vm385 = vcmp.lt.s32.totalorder %v319, 1
      %v386 = vsel %vm385, %v378, %v382
      %v387 = vsel %vm385, %v380, %v384
      %v388 = vsel %vm385, %v382, %v378
      %v389 = vsel %vm385, %v384, %v380
      %s390 = scalar_lea.vmem %s1, 96
      %v391 = vld [vmem:[%s390] sm:$0xff]
      %v392 = vld [vmem:[%s390 + $0x8] sm:$0xff]
      %v393 = vld [vmem:[%s390 + $0x10] sm:$0xff]
      %v394 = vld [vmem:[%s390 + $0x18] sm:$0xff]
      %v395 = vmul.f32 %v388, %v391
      %v396 = vmul.f32 %v386, %v392
      %v397 = vmul.f32 %v389, %v393
      %v398 = vmul.f32 %v387, %v394
      %399 = vrot.lane.b32.xlu0 %v306, 127
      %v400 = vpop.permute.xlu0 %399
      %401 = vrot.lane.b32.xlu0 %v308, 127
      %v402 = vpop.permute.xlu0 %401
      %403 = vrot.lane.b32.xlu0 %v307, 127
      %v404 = vpop.permute.xlu0 %403
      %405 = vrot.lane.b32.xlu0 %v309, 127
      %v406 = vpop.permute.xlu0 %405
      %vm407 = vcmp.lt.s32.totalorder %v319, 127
      %v408 = vsel %vm407, %v400, %v404
      %v409 = vsel %vm407, %v402, %v406
      %v410 = vsel %vm407, %v404, %v400
      %v411 = vsel %vm407, %v406, %v402
      %s412 = scalar_lea.vmem %s1, 160
      %v413 = vld [vmem:[%s412] sm:$0xff]
      %v414 = vld [vmem:[%s412 + $0x8] sm:$0xff]
      %v415 = vld [vmem:[%s412 + $0x10] sm:$0xff]
      %v416 = vld [vmem:[%s412 + $0x18] sm:$0xff]
      %v417 = vmul.f32 %v408, %v413
      %v418 = vmul.f32 %v410, %v414
      %v419 = vmul.f32 %v409, %v415
      %v420 = vmul.f32 %v411, %v416
      %421 = vrot.lane.b32.xlu0 %v306, 113
      %v422 = vpop.permute.xlu0 %421
      %423 = vrot.lane.b32.xlu0 %v308, 113
      %v424 = vpop.permute.xlu0 %423
      %425 = vrot.lane.b32.xlu0 %v307, 113
      %v426 = vpop.permute.xlu0 %425
      %427 = vrot.lane.b32.xlu0 %v309, 113
      %v428 = vpop.permute.xlu0 %427
      %vm429 = vcmp.lt.s32.totalorder %v319, 113
      %v430 = vsel %vm429, %v422, %v426
      %v431 = vsel %vm429, %v424, %v428
      %v432 = vsel %vm429, %v426, %v422
      %v433 = vsel %vm429, %v428, %v424
      %s434 = scalar_lea.vmem %s1, 192
      %v435 = vld [vmem:[%s434] sm:$0xff]
      %v436 = vld [vmem:[%s434 + $0x8] sm:$0xff]
      %v437 = vld [vmem:[%s434 + $0x10] sm:$0xff]
      %v438 = vld [vmem:[%s434 + $0x18] sm:$0xff]
      %v439 = vmul.f32 %v430, %v435
      %v440 = vmul.f32 %v432, %v436
      %v441 = vmul.f32 %v431, %v437
      %v442 = vmul.f32 %v433, %v438
      %443 = vrot.lane.b32.xlu0 %v306, 112
      %v444 = vpop.permute.xlu0 %443
      %445 = vrot.lane.b32.xlu0 %v308, 112
      %v446 = vpop.permute.xlu0 %445
      %447 = vrot.lane.b32.xlu0 %v307, 112
      %v448 = vpop.permute.xlu0 %447
      %449 = vrot.lane.b32.xlu0 %v309, 112
      %v450 = vpop.permute.xlu0 %449
      %vm451 = vcmp.lt.s32.totalorder %v319, 112
      %v452 = vsel %vm451, %v444, %v448
      %v453 = vsel %vm451, %v446, %v450
      %v454 = vsel %vm451, %v448, %v444
      %v455 = vsel %vm451, %v450, %v446
      %s456 = scalar_lea.vmem %s1, 224
      %v457 = vld [vmem:[%s456] sm:$0xff]
      %v458 = vld [vmem:[%s456 + $0x8] sm:$0xff]
      %v459 = vld [vmem:[%s456 + $0x10] sm:$0xff]
      %v460 = vld [vmem:[%s456 + $0x18] sm:$0xff]
      %v461 = vmul.f32 %v452, %v457
      %v462 = vmul.f32 %v454, %v458
      %v463 = vmul.f32 %v453, %v459
      %v464 = vmul.f32 %v455, %v460
      %465 = vrot.lane.b32.xlu0 %v306, 111
      %v466 = vpop.permute.xlu0 %465
      %467 = vrot.lane.b32.xlu0 %v308, 111
      %v468 = vpop.permute.xlu0 %467
      %469 = vrot.lane.b32.xlu0 %v307, 111
      %v470 = vpop.permute.xlu0 %469
      %471 = vrot.lane.b32.xlu0 %v309, 111
      %v472 = vpop.permute.xlu0 %471
      %vm473 = vcmp.lt.s32.totalorder %v319, 111
      %v474 = vsel %vm473, %v466, %v470
      %v475 = vsel %vm473, %v468, %v472
      %v476 = vsel %vm473, %v470, %v466
      %v477 = vsel %vm473, %v472, %v468
      %s478 = scalar_lea.vmem %s1, 256
      %v479 = vld [vmem:[%s478] sm:$0xff]
      %v480 = vld [vmem:[%s478 + $0x8] sm:$0xff]
      %v481 = vld [vmem:[%s478 + $0x10] sm:$0xff]
      %v482 = vld [vmem:[%s478 + $0x18] sm:$0xff]
      %v483 = vmul.f32 %v474, %v479
      %v484 = vmul.f32 %v476, %v480
      %v485 = vmul.f32 %v475, %v481
      %v486 = vmul.f32 %v477, %v482
      %v487 = vld [vmem:[%s2] sm:$0xff]
      %v488 = vld [vmem:[%s2 + $0x8] sm:$0xff]
      %v489 = vld [vmem:[%s2 + $0x10] sm:$0xff]
      %v490 = vld [vmem:[%s2 + $0x18] sm:$0xff]
      %v491 = vld [vmem:[%s3] sm:$0xff]
      %v492 = vld [vmem:[%s3 + $0x8] sm:$0xff]
      %494 = vset.pattern.permute.xlu0 0
      %495 = vperm.xlu0 %494, %v491
      %v496 = vpop.permute.xlu0 %495
      %499 = vset.pattern.permute.xlu0 0
      %500 = vperm.xlu0 %499, %v492
      %v501 = vpop.permute.xlu0 %500
      %vm503 = vcmask 130048
      %v505 = vsel %vm503, %v488, 0
      %v508 = vsel %vm503, %v490, 0
      %510 = vmatprep.subr.mxu0 %v330
      %511 = vmatpush1.msra.mxu0 %v329
      %512 = vmatprep.subr.mxu0 %v332
      %513 = vmatpush1.msra.mxu0 %v331
      %514 = vmatprep.subr.mxu0 %v352
      %515 = vmatpush1.msra.mxu0 %v351
      %516 = vmatprep.subr.mxu0 %v354
      %517 = vmatpush1.msra.mxu0 %v353
      %518 = vmatprep.subr.mxu0 %v374
      %519 = vmatpush1.msra.mxu0 %v373
      %520 = vmatprep.subr.mxu0 %v376
      %521 = vmatpush1.msra.mxu0 %v375
      %522 = vmatprep.subr.mxu0 %v396
      %523 = vmatpush1.msra.mxu0 %v395
      %524 = vmatprep.subr.mxu0 %v398
      %525 = vmatpush1.msra.mxu0 %v397
      %526 = vmatprep.subr.mxu0 %v307
      %527 = vmatpush1.msra.mxu0 %v306
      %528 = vmatprep.subr.mxu0 %v309
      %529 = vmatpush1.msra.mxu0 %v308
      %530 = vmatprep.subr.mxu0 %v418
      %531 = vmatpush1.msra.mxu0 %v417
      %532 = vmatprep.subr.mxu0 %v420
      %533 = vmatpush1.msra.mxu0 %v419
      %534 = vmatprep.subr.mxu0 %v440
      %535 = vmatpush1.msra.mxu0 %v439
      %536 = vmatprep.subr.mxu0 %v442
      %537 = vmatpush1.msra.mxu0 %v441
      %538 = vmatprep.subr.mxu0 %v462
      %539 = vmatpush1.msra.mxu0 %v461
      %540 = vmatprep.subr.mxu0 %v464
      %541 = vmatpush1.msra.mxu0 %v463
      %542 = vmatprep.subr.mxu0 %v484
      %543 = vmatpush1.msra.mxu0 %v483
      %544 = vmatprep.subr.mxu0 %v486
      %545 = vmatpush1.msra.mxu0 %v485
      %546 = vmatprep.subr.mxu0 0.0
      %547 = vmatpush1.msra.mxu0 0.0
      %548 = vmatprep.subr.mxu0 0.0
      %549 = vmatpush1.msra.mxu0 0.0
      %550 = vmatprep.subr.mxu0 0.0
      %551 = vmatpush1.msra.mxu0 0.0
      %552 = vmatprep.subr.mxu0 0.0
      %553 = vmatpush1.msra.mxu0 0.0
      %554 = vmatprep.subr.mxu0 0.0
      %555 = vmatpush1.msra.mxu0 0.0
      %556 = vmatprep.subr.mxu0 0.0
      %557 = vmatpush1.msra.mxu0 0.0
      %558 = vmatprep.subr.mxu0 0.0
      %559 = vmatpush1.msra.mxu0 0.0
      %560 = vmatprep.subr.mxu0 0.0
      %561 = vmatpush1.msra.mxu0 0.0
      %562 = vmatprep.subr.mxu0 0.0
      %563 = vmatpush1.msra.mxu0 0.0
      %564 = vmatprep.subr.mxu0 0.0
      %565 = vmatpush1.msra.mxu0 0.0
      %566 = vmatprep.subr.mxu0 0.0
      %567 = vmatpush1.msra.mxu0 0.0
      %568 = vmatprep.subr.mxu0 0.0
      %569 = vmatpush1.msra.mxu0 0.0
      %570 = vmatprep.subr.mxu0 0.0
      %571 = vmatpush1.msra.mxu0 0.0
      %572 = vmatprep.subr.mxu0 0.0
      %573 = vmatpush1.msra.mxu0 0.0
      %574 = vmatprep.mubr.f32.mxu0 %v505
      %575 = vmatmul.mubr.f32.gmra.mrb[0].mxu0 %v487
      %v576 = vpop.f32.mrb[0].mxu0
      %v577 = vadd.f32 %v496, %v576
      %v578 = vpop.f32.mrb[0].mxu0
      %v579 = vadd.f32 %v496, %v578
      %580 = vmatprep.mubr.f32.mxu0 %v508
      %581 = vmatmul.mubr.f32.gmra.mrb[0].mxu0 %v489
      %v582 = vpop.f32.mrb[0].mxu0
      %v583 = vadd.f32 %v501, %v582
      %v584 = vpop.f32.mrb[0].mxu0
      %v585 = vadd.f32 %v501, %v584
      %586 = vdwg.mxu0
      %v587 = vmax.f32 %v577, 0.0
      %v588 = vmax.f32 %v579, 0.0
      %v589 = vmax.f32 %v583, 0.0
      %v590 = vmax.f32 %v585, 0.0
      %591 = vrot.lane.b32.xlu0 %v587, 17
      %v592 = vpop.permute.xlu0 %591
      %593 = vrot.lane.b32.xlu0 %v589, 17
      %v594 = vpop.permute.xlu0 %593
      %595 = vrot.lane.b32.xlu0 %v588, 17
      %v596 = vpop.permute.xlu0 %595
      %597 = vrot.lane.b32.xlu0 %v590, 17
      %v598 = vpop.permute.xlu0 %597
      %v599 = vsel %vm320, %v592, %v596
      %v600 = vsel %vm320, %v594, %v598
      %v601 = vsel %vm320, %v596, %v592
      %v602 = vsel %vm320, %v598, %v594
      %v603 = vmul.f32 %v601, %v325
      %v604 = vmul.f32 %v599, %v326
      %v605 = vmul.f32 %v602, %v327
      %v606 = vmul.f32 %v600, %v328
      %607 = vrot.lane.b32.xlu0 %v587, 16
      %v608 = vpop.permute.xlu0 %607
      %609 = vrot.lane.b32.xlu0 %v589, 16
      %v610 = vpop.permute.xlu0 %609
      %611 = vrot.lane.b32.xlu0 %v588, 16
      %v612 = vpop.permute.xlu0 %611
      %613 = vrot.lane.b32.xlu0 %v590, 16
      %v614 = vpop.permute.xlu0 %613
      %v615 = vsel %vm341, %v608, %v612
      %v616 = vsel %vm341, %v610, %v614
      %v617 = vsel %vm341, %v612, %v608
      %v618 = vsel %vm341, %v614, %v610
      %v619 = vmul.f32 %v617, %v347
      %v620 = vmul.f32 %v615, %v348
      %v621 = vmul.f32 %v618, %v349
      %v622 = vmul.f32 %v616, %v350
      %623 = vrot.lane.b32.xlu0 %v587, 15
      %v624 = vpop.permute.xlu0 %623
      %625 = vrot.lane.b32.xlu0 %v589, 15
      %v626 = vpop.permute.xlu0 %625
      %627 = vrot.lane.b32.xlu0 %v588, 15
      %v628 = vpop.permute.xlu0 %627
      %629 = vrot.lane.b32.xlu0 %v590, 15
      %v630 = vpop.permute.xlu0 %629
      %v631 = vsel %vm363, %v624, %v628
      %v632 = vsel %vm363, %v626, %v630
      %v633 = vsel %vm363, %v628, %v624
      %v634 = vsel %vm363, %v630, %v626
      %v635 = vmul.f32 %v633, %v369
      %v636 = vmul.f32 %v631, %v370
      %v637 = vmul.f32 %v634, %v371
      %v638 = vmul.f32 %v632, %v372
      %639 = vrot.lane.b32.xlu0 %v587, 1
      %v640 = vpop.permute.xlu0 %639
      %641 = vrot.lane.b32.xlu0 %v589, 1
      %v642 = vpop.permute.xlu0 %641
      %643 = vrot.lane.b32.xlu0 %v588, 1
      %v644 = vpop.permute.xlu0 %643
      %645 = vrot.lane.b32.xlu0 %v590, 1
      %v646 = vpop.permute.xlu0 %645
      %v647 = vsel %vm385, %v640, %v644
      %v648 = vsel %vm385, %v642, %v646
      %v649 = vsel %vm385, %v644, %v640
      %v650 = vsel %vm385, %v646, %v642
      %v651 = vmul.f32 %v649, %v391
      %v652 = vmul.f32 %v647, %v392
      %v653 = vmul.f32 %v650, %v393
      %v654 = vmul.f32 %v648, %v394
      %655 = vrot.lane.b32.xlu0 %v587, 127
      %v656 = vpop.permute.xlu0 %655
      %657 = vrot.lane.b32.xlu0 %v589, 127
      %v658 = vpop.permute.xlu0 %657
      %659 = vrot.lane.b32.xlu0 %v588, 127
      %v660 = vpop.permute.xlu0 %659
      %661 = vrot.lane.b32.xlu0 %v590, 127
      %v662 = vpop.permute.xlu0 %661
      %v663 = vsel %vm407, %v656, %v660
      %v664 = vsel %vm407, %v658, %v662
      %v665 = vsel %vm407, %v660, %v656
      %v666 = vsel %vm407, %v662, %v658
      %v667 = vmul.f32 %v663, %v413
      %v668 = vmul.f32 %v665, %v414
      %v669 = vmul.f32 %v664, %v415
      %v670 = vmul.f32 %v666, %v416
      %671 = vrot.lane.b32.xlu0 %v587, 113
      %v672 = vpop.permute.xlu0 %671
      %673 = vrot.lane.b32.xlu0 %v589, 113
      %v674 = vpop.permute.xlu0 %673
      %675 = vrot.lane.b32.xlu0 %v588, 113
      %v676 = vpop.permute.xlu0 %675
      %677 = vrot.lane.b32.xlu0 %v590, 113
      %v678 = vpop.permute.xlu0 %677
      %v679 = vsel %vm429, %v672, %v676
      %v680 = vsel %vm429, %v674, %v678
      %v681 = vsel %vm429, %v676, %v672
      %v682 = vsel %vm429, %v678, %v674
      %v683 = vmul.f32 %v679, %v435
      %v684 = vmul.f32 %v681, %v436
      %v685 = vmul.f32 %v680, %v437
      %v686 = vmul.f32 %v682, %v438
      %687 = vrot.lane.b32.xlu0 %v587, 112
      %v688 = vpop.permute.xlu0 %687
      %689 = vrot.lane.b32.xlu0 %v589, 112
      %v690 = vpop.permute.xlu0 %689
      %691 = vrot.lane.b32.xlu0 %v588, 112
      %v692 = vpop.permute.xlu0 %691
      %693 = vrot.lane.b32.xlu0 %v590, 112
      %v694 = vpop.permute.xlu0 %693
      %v695 = vsel %vm451, %v688, %v692
      %v696 = vsel %vm451, %v690, %v694
      %v697 = vsel %vm451, %v692, %v688
      %v698 = vsel %vm451, %v694, %v690
      %v699 = vmul.f32 %v695, %v457
      %v700 = vmul.f32 %v697, %v458
      %v701 = vmul.f32 %v696, %v459
      %v702 = vmul.f32 %v698, %v460
      %703 = vrot.lane.b32.xlu0 %v587, 111
      %v704 = vpop.permute.xlu0 %703
      %705 = vrot.lane.b32.xlu0 %v589, 111
      %v706 = vpop.permute.xlu0 %705
      %707 = vrot.lane.b32.xlu0 %v588, 111
      %v708 = vpop.permute.xlu0 %707
      %709 = vrot.lane.b32.xlu0 %v590, 111
      %v710 = vpop.permute.xlu0 %709
      %v711 = vsel %vm473, %v704, %v708
      %v712 = vsel %vm473, %v706, %v710
      %v713 = vsel %vm473, %v708, %v704
      %v714 = vsel %vm473, %v710, %v706
      %v715 = vmul.f32 %v711, %v479
      %v716 = vmul.f32 %v713, %v480
      %v717 = vmul.f32 %v712, %v481
      %v718 = vmul.f32 %v714, %v482
      %v719 = vld [vmem:[%s4] sm:$0xff]
      %v720 = vld [vmem:[%s4 + $0x8] sm:$0xff]
      %v721 = vld [vmem:[%s4 + $0x10] sm:$0xff]
      %v722 = vld [vmem:[%s4 + $0x18] sm:$0xff]
      %v723 = vld [vmem:[%s5] sm:$0xff]
      %v724 = vld [vmem:[%s5 + $0x8] sm:$0xff]
      %726 = vset.pattern.permute.xlu0 0
      %727 = vperm.xlu0 %726, %v723
      %v728 = vpop.permute.xlu0 %727
      %731 = vset.pattern.permute.xlu0 0
      %732 = vperm.xlu0 %731, %v724
      %v733 = vpop.permute.xlu0 %732
      %v736 = vsel %vm503, %v720, 0
      %v739 = vsel %vm503, %v722, 0
      %741 = vmatprep.subr.mxu0 %v604
      %742 = vmatpush1.msra.mxu0 %v603
      %743 = vmatprep.subr.mxu0 %v606
      %744 = vmatpush1.msra.mxu0 %v605
      %745 = vmatprep.subr.mxu0 %v620
      %746 = vmatpush1.msra.mxu0 %v619
      %747 = vmatprep.subr.mxu0 %v622
      %748 = vmatpush1.msra.mxu0 %v621
      %749 = vmatprep.subr.mxu0 %v636
      %750 = vmatpush1.msra.mxu0 %v635
      %751 = vmatprep.subr.mxu0 %v638
      %752 = vmatpush1.msra.mxu0 %v637
      %753 = vmatprep.subr.mxu0 %v652
      %754 = vmatpush1.msra.mxu0 %v651
      %755 = vmatprep.subr.mxu0 %v654
      %756 = vmatpush1.msra.mxu0 %v653
      %757 = vmatprep.subr.mxu0 %v588
      %758 = vmatpush1.msra.mxu0 %v587
      %759 = vmatprep.subr.mxu0 %v590
      %760 = vmatpush1.msra.mxu0 %v589
      %761 = vmatprep.subr.mxu0 %v668
      %762 = vmatpush1.msra.mxu0 %v667
      %763 = vmatprep.subr.mxu0 %v670
      %764 = vmatpush1.msra.mxu0 %v669
      %765 = vmatprep.subr.mxu0 %v684
      %766 = vmatpush1.msra.mxu0 %v683
      %767 = vmatprep.subr.mxu0 %v686
      %768 = vmatpush1.msra.mxu0 %v685
      %769 = vmatprep.subr.mxu0 %v700
      %770 = vmatpush1.msra.mxu0 %v699
      %771 = vmatprep.subr.mxu0 %v702
      %772 = vmatpush1.msra.mxu0 %v701
      %773 = vmatprep.subr.mxu0 %v716
      %774 = vmatpush1.msra.mxu0 %v715
      %775 = vmatprep.subr.mxu0 %v718
      %776 = vmatpush1.msra.mxu0 %v717
      %777 = vmatprep.subr.mxu0 0.0
      %778 = vmatpush1.msra.mxu0 0.0
      %779 = vmatprep.subr.mxu0 0.0
      %780 = vmatpush1.msra.mxu0 0.0
      %781 = vmatprep.subr.mxu0 0.0
      %782 = vmatpush1.msra.mxu0 0.0
      %783 = vmatprep.subr.mxu0 0.0
      %784 = vmatpush1.msra.mxu0 0.0
      %785 = vmatprep.subr.mxu0 0.0
      %786 = vmatpush1.msra.mxu0 0.0
      %787 = vmatprep.subr.mxu0 0.0
      %788 = vmatpush1.msra.mxu0 0.0
      %789 = vmatprep.subr.mxu0 0.0
      %790 = vmatpush1.msra.mxu0 0.0
      %791 = vmatprep.subr.mxu0 0.0
      %792 = vmatpush1.msra.mxu0 0.0
      %793 = vmatprep.subr.mxu0 0.0
      %794 = vmatpush1.msra.mxu0 0.0
      %795 = vmatprep.subr.mxu0 0.0
      %796 = vmatpush1.msra.mxu0 0.0
      %797 = vmatprep.subr.mxu0 0.0
      %798 = vmatpush1.msra.mxu0 0.0
      %799 = vmatprep.subr.mxu0 0.0
      %800 = vmatpush1.msra.mxu0 0.0
      %801 = vmatprep.subr.mxu0 0.0
      %802 = vmatpush1.msra.mxu0 0.0
      %803 = vmatprep.subr.mxu0 0.0
      %804 = vmatpush1.msra.mxu0 0.0
      %805 = vmatprep.mubr.f32.mxu0 %v736
      %806 = vmatmul.mubr.f32.gmra.mrb[0].mxu0 %v719
      %v807 = vpop.f32.mrb[0].mxu0
      %v808 = vadd.f32 %v728, %v807
      %v809 = vpop.f32.mrb[0].mxu0
      %v810 = vadd.f32 %v728, %v809
      %811 = vmatprep.mubr.f32.mxu0 %v739
      %812 = vmatmul.mubr.f32.gmra.mrb[0].mxu0 %v721
      %v813 = vpop.f32.mrb[0].mxu0
      %v814 = vadd.f32 %v733, %v813
      %v815 = vpop.f32.mrb[0].mxu0
      %v816 = vadd.f32 %v733, %v815
      %817 = vdwg.mxu0
      %v818 = vmax.f32 %v808, 0.0
      %v819 = vmax.f32 %v810, 0.0
      %v820 = vmax.f32 %v814, 0.0
      %v821 = vmax.f32 %v816, 0.0
      %v822 = vld [vmem:[%s6] sm:$0xff]
      %v823 = vld [vmem:[%s6 + $0x8] sm:$0xff]
      %v824 = vld [vmem:[%s7] sm:$0xff]
      %v825 = vld [vmem:[%s7 + $0x8] sm:$0xff]
      %827 = vset.pattern.permute.xlu0 0
      %828 = vperm.xlu0 %827, %v824
      %v829 = vpop.permute.xlu0 %828
      %832 = vset.pattern.permute.xlu0 0
      %833 = vperm.xlu0 %832, %v825
      %v834 = vpop.permute.xlu0 %833
      %v837 = vsel %vm503, %v822, 0
      %v840 = vsel %vm503, %v823, 0
      %842 = vmatprep.subr.mxu0 %v819
      %843 = vmatpush1.msra.mxu0 %v818
      %844 = vmatprep.subr.mxu0 %v821
      %845 = vmatpush1.msra.mxu0 %v820
      %846 = vmatprep.subr.mxu0 0.0
      %847 = vmatpush1.msra.mxu0 0.0
      %848 = vmatprep.subr.mxu0 0.0
      %849 = vmatpush1.msra.mxu0 0.0
      %850 = vmatprep.subr.mxu0 0.0
      %851 = vmatpush1.msra.mxu0 0.0
      %852 = vmatprep.subr.mxu0 0.0
      %853 = vmatpush1.msra.mxu0 0.0
      %854 = vmatprep.subr.mxu0 0.0
      %855 = vmatpush1.msra.mxu0 0.0
      %856 = vmatprep.subr.mxu0 0.0
      %857 = vmatpush1.msra.mxu0 0.0
      %858 = vmatprep.subr.mxu0 0.0
      %859 = vmatpush1.msra.mxu0 0.0
      %860 = vmatprep.subr.mxu0 0.0
      %861 = vmatpush1.msra.mxu0 0.0
      %862 = vmatprep.subr.mxu0 0.0
      %863 = vmatpush1.msra.mxu0 0.0
      %864 = vmatprep.subr.mxu0 0.0
      %865 = vmatpush1.msra.mxu0 0.0
      %866 = vmatprep.subr.mxu0 0.0
      %867 = vmatpush1.msra.mxu0 0.0
      %868 = vmatprep.subr.mxu0 0.0
      %869 = vmatpush1.msra.mxu0 0.0
      %870 = vmatprep.subr.mxu0 0.0
      %871 = vmatpush1.msra.mxu0 0.0
      %872 = vmatprep.subr.mxu0 0.0
      %873 = vmatpush1.msra.mxu0 0.0
      %874 = vmatprep.subr.mxu0 0.0
      %875 = vmatpush1.msra.mxu0 0.0
      %876 = vmatprep.subr.mxu0 0.0
      %877 = vmatpush1.msra.mxu0 0.0
      %878 = vmatprep.subr.mxu0 0.0
      %879 = vmatpush1.msra.mxu0 0.0
      %880 = vmatprep.subr.mxu0 0.0
      %881 = vmatpush1.msra.mxu0 0.0
      %882 = vmatprep.subr.mxu0 0.0
      %883 = vmatpush1.msra.mxu0 0.0
      %884 = vmatprep.subr.mxu0 0.0
      %885 = vmatpush1.msra.mxu0 0.0
      %886 = vmatprep.subr.mxu0 0.0
      %887 = vmatpush1.msra.mxu0 0.0
      %888 = vmatprep.subr.mxu0 0.0
      %889 = vmatpush1.msra.mxu0 0.0
      %890 = vmatprep.subr.mxu0 0.0
      %891 = vmatpush1.msra.mxu0 0.0
      %892 = vmatprep.subr.mxu0 0.0
      %893 = vmatpush1.msra.mxu0 0.0
      %894 = vmatprep.subr.mxu0 0.0
      %895 = vmatpush1.msra.mxu0 0.0
      %896 = vmatprep.subr.mxu0 0.0
      %897 = vmatpush1.msra.mxu0 0.0
      %898 = vmatprep.subr.mxu0 0.0
      %899 = vmatpush1.msra.mxu0 0.0
      %900 = vmatprep.subr.mxu0 0.0
      %901 = vmatpush1.msra.mxu0 0.0
      %902 = vmatprep.subr.mxu0 0.0
      %903 = vmatpush1.msra.mxu0 0.0
      %904 = vmatprep.subr.mxu0 0.0
      %905 = vmatpush1.msra.mxu0 0.0
      %906 = vmatprep.mubr.f32.mxu0 0.0
      %907 = vmatmul.mubr.f32.gmra.mrb[0].mxu0 %v837
      %v908 = vpop.f32.mrb[0].mxu0
      %v909 = vadd.f32 %v829, %v908
      %v910 = vpop.f32.mrb[0].mxu0
      %v911 = vadd.f32 %v829, %v910
      %912 = vmatprep.mubr.f32.mxu0 0.0
      %913 = vmatmul.mubr.f32.gmra.mrb[0].mxu0 %v840
      %v914 = vpop.f32.mrb[0].mxu0
      %v915 = vadd.f32 %v834, %v914
      %v916 = vpop.f32.mrb[0].mxu0
      %v917 = vadd.f32 %v834, %v916
      %918 = vdwg.mxu0
      %v919 = vadd.f32 %v909, %v306
      %v920 = vadd.f32 %v911, %v307
      %v921 = vadd.f32 %v915, %v308
      %v922 = vadd.f32 %v917, %v309
      %v923 = vmax.f32 %v919, 0.0
      %v924 = vmax.f32 %v920, 0.0
      %v925 = vmax.f32 %v921, 0.0
      %v926 = vmax.f32 %v922, 0.0
      %927 = vst [vmem:[%s305] sm:$0xff] %v923
      %928 = vst [vmem:[%s305 + $0x8] sm:$0xff] %v924
      %929 = vst [vmem:[%s305 + $0x10] sm:$0xff] %v925
      %930 = vst [vmem:[%s305 + $0x18] sm:$0xff] %v926
      %p931 = scmp.lt.s32.totalorder %s19, 1
      %s932 = scalar_select %p931, %s19, 1
      %s933 = smul.addr %s932, 4
      %s934 = smul.addr %s933, 8
      %s935 = scalar_lea.vmem %s8, %s934
      // Predicated region
      $region53: #{eresidual_block.1} parent=51 // pred_check
        %p936 = pneg %p210
      $region54: #{eresidual_block.1} parent=51 // pred_check_branch
        %938 = sbr.rel (%p936) target = $region56
      $region55: #{eresidual_block.1} parent=51 // pred_region
        _
      $region56: #{eresidual_block.1} parent=51 // pred_fallthru
        _
    $region52: #{eresidual_block.1} parent=5 // pred_fallthru
      _
    %p939 = scmp.le.s32.totalorder 2, %s14
    // Predicated region
    $region57: #{eresidual_block.1} parent=5 // pred_check
      %p940 = pneg %p939
    $region58: #{eresidual_block.1} parent=5 // pred_check_branch
      %942 = sbr.rel (%p940) target = $region60
    $region59: #{eresidual_block.1} parent=5 // pred_region
      %s943 = ssub.s32 %s14, 2
      // Predicated region
      $region61: #{eresidual_block.1} parent=59 // pred_check
        %p944 = pneg %p216
      $region62: #{eresidual_block.1} parent=59 // pred_check_branch
        %946 = sbr.rel (%p944) target = $region64
      $region63: #{eresidual_block.1} parent=59 // pred_region
        %p947 = scmp.lt.s32.totalorder %s20, 1
        %s948 = scalar_select %p947, %s20, 1
        %s949 = smul.addr %s948, 4
        %s950 = smul.addr %s949, 8
        %s951 = scalar_lea.vmem %s8, %s950
      $region64: #{eresidual_block.1} parent=59 // pred_fallthru
        _
    $region60: #{eresidual_block.1} parent=5 // pred_fallthru
      _
  $region6: #{eresidual_block.1} parent=0 // loop_footer
    %s18 = sadd.s32 1, %s14
  $region7: #{eresidual_block.1} parent=0 // loop_footer_branch
    %13 = sbr.rel target = $region3
  $region8: #{eresidual_block.1} parent=0 // loop_exit
    _

</llo_original>
